<compile_context>
chip_gen: v7x
topology: tpu7x:2x2x1
jax: 0.10.0
libtpu: 0.0.40
codegen_flags: <defaults>
</compile_context>

<pallas_src>
import jax
import jax.numpy as jnp
from jax.experimental import pallas as pl
from jax.experimental.pallas import tpu as pltpu


def _global_attention_kernel(h_t_ref, wat_ref, h_s_ref, mask_ref,
                             almt_ref, ctx_ref):
    # Project the target hidden state: u = h_t @ Wa^T   -> (bb, ds)   (MXU)
    h_t = h_t_ref[...].astype(jnp.float32)
    wat = wat_ref[...].astype(jnp.float32)
    u = jnp.dot(h_t, wat, preferred_element_type=jnp.float32)

    h_s = h_s_ref[...].astype(jnp.float32)                      # (bb, sl, ds)

    # scores[b, s] = <h_s[b, s, :], u[b, :]>  ==  ((h_s @ Wa) * h_t).sum(-1)
    scores = jnp.sum(h_s * u[:, None, :], axis=-1)              # (bb, sl)

    mask = mask_ref[...]                                        # (bb, sl) f32
    scores = jnp.where(mask > 0.0, scores, jnp.float32(-9999.9))

    # log_softmax(scores, dim=0).exp() == numerically stable softmax over sl.
    m = jnp.max(scores, axis=-1, keepdims=True)
    e = jnp.exp(scores - m)
    denom = jnp.sum(e, axis=-1, keepdims=True)
    p = e / denom                                               # (bb, sl)

    # ctx[b, :] = sum_s p[b, s] * h_s[b, s, :]
    ctx = jnp.sum(p[:, :, None] * h_s, axis=1)                  # (bb, ds)

    almt_ref[...] = p.astype(almt_ref.dtype)
    ctx_ref[...] = ctx.astype(ctx_ref.dtype)


def _round_up(x, m):
    return ((x + m - 1) // m) * m


@jax.jit
def global_attention(h_t, h_s, mask_src, Wa):
    """JAX/Pallas equivalent of GlobalAttention.forward.

    Args:
      h_t:      (bs, dt)      target hidden state
      h_s:      (sl, bs, ds)  source hidden states
      mask_src: (sl, bs)      bool, True = valid source position
      Wa:       (ds, dt)      attention projection
    Returns:
      almt_distr: (bs, sl), ctx: (bs, ds)
    """
    sl, bs, ds = h_s.shape
    dt = h_t.shape[-1]
    dtype = h_t.dtype
    itemsize = max(jnp.dtype(dtype).itemsize, 4)  # kernel accumulates in f32

    # Batch-major, feature-last layout (layout plumbing only, outside kernel).
    h_s_b = jnp.transpose(h_s, (1, 0, 2))                          # (bs, sl, ds)
    mask_b = jnp.transpose(mask_src, (1, 0)).astype(jnp.float32)   # (bs, sl)
    wat = jnp.transpose(Wa, (1, 0))                                # (dt, ds)

    # Batch tile: the largest 8-aligned block whose double-buffered blocks plus
    # in-kernel f32 temporaries stay well inside the default 32 MiB scoped VMEM
    # (so the same tile is also safe on v7x's smaller 64 MiB physical VMEM).
    per_row_bytes = (sl * ds + dt + 2 * sl + ds) * itemsize
    vmem_budget = 24 * 1024 * 1024 - 2 * dt * ds * itemsize
    bb_cap = max(8, (vmem_budget // (4 * per_row_bytes)) // 8 * 8)
    bb = int(min(bb_cap, _round_up(bs, 8)))
    bs_pad = _round_up(bs, bb)
    grid = (bs_pad // bb,)

    # Pad the batch axis instead of falling back to one giant un-tiled block.
    if bs_pad != bs:
        pad = bs_pad - bs
        h_t_p = jnp.pad(h_t, ((0, pad), (0, 0)))
        h_s_p = jnp.pad(h_s_b, ((0, pad), (0, 0), (0, 0)))
        mask_p = jnp.pad(mask_b, ((0, pad), (0, 0)))
    else:
        h_t_p, h_s_p, mask_p = h_t, h_s_b, mask_b

    flops = 2 * bs_pad * dt * ds + 4 * bs_pad * sl * ds + 6 * bs_pad * sl
    bytes_accessed = (bs_pad * (sl * ds + dt + 2 * sl + ds) + dt * ds) * itemsize

    almt, ctx = pl.pallas_call(
        _global_attention_kernel,
        out_shape=(jax.ShapeDtypeStruct((bs_pad, sl), dtype),
                   jax.ShapeDtypeStruct((bs_pad, ds), dtype)),
        grid_spec=pltpu.PrefetchScalarGridSpec(
            num_scalar_prefetch=0,
            grid=grid,
            in_specs=[
                pl.BlockSpec((bb, dt), lambda i: (i, 0)),         # h_t
                pl.BlockSpec((dt, ds), lambda i: (0, 0)),         # Wa^T (resident)
                pl.BlockSpec((bb, sl, ds), lambda i: (i, 0, 0)),  # h_s (batch-major)
                pl.BlockSpec((bb, sl), lambda i: (i, 0)),         # mask
            ],
            out_specs=[
                pl.BlockSpec((bb, sl), lambda i: (i, 0)),         # almt_distr
                pl.BlockSpec((bb, ds), lambda i: (i, 0)),         # ctx
            ],
        ),
        compiler_params=pltpu.CompilerParams(
            dimension_semantics=("parallel",)),
        cost_estimate=pl.CostEstimate(
            flops=flops,
            transcendentals=bs_pad * sl,
            bytes_accessed=bytes_accessed),
    )(h_t_p, wat, h_s_p, mask_p)

    return almt[:bs], ctx[:bs]


def _reference(h_t, h_s, mask_src, Wa):
    """Pure-JAX reference mirroring the PyTorch forward literally."""
    Wh_s = jnp.einsum('sbd,de->sbe', h_s, Wa)                  # (sl, bs, dt)
    scores = jnp.sum(Wh_s * h_t[None, :, :], axis=-1)          # (sl, bs)
    scores = jnp.where(mask_src, scores, jnp.full_like(scores, -9999.9))
    almt = jnp.exp(jax.nn.log_softmax(scores, axis=0))         # (sl, bs)
    ctx = jnp.sum(almt[:, :, None] * h_s, axis=0)              # (bs, ds)
    return almt.T, ctx


if __name__ == "__main__":
    # Small shapes consistent with the module: source len 8, batch 2,
    # input_src_size 32, input_tgt_size 48.
    sl, bs, ds, dt = 8, 2, 32, 48

    key = jax.random.PRNGKey(0)
    k0, k1, k2 = jax.random.split(key, 3)
    h_s = jax.random.normal(k0, (sl, bs, ds), dtype=jnp.float32)
    h_t = jax.random.normal(k1, (bs, dt), dtype=jnp.float32)
    # xavier_normal_ init for Wa, as in the module.
    wa_std = (2.0 / (ds + dt)) ** 0.5
    Wa = wa_std * jax.random.normal(k2, (ds, dt), dtype=jnp.float32)

    # Length-style source mask: batch 0 attends to all 8 positions, batch 1 to 5.
    lengths = jnp.array([8, 5], dtype=jnp.int32)
    mask_src = jnp.arange(sl)[:, None] < lengths[None, :]      # (sl, bs) bool

    almt, ctx = global_attention(h_t, h_s, mask_src, Wa)
    almt = jax.block_until_ready(almt)
    ctx = jax.block_until_ready(ctx)

    almt_ref, ctx_ref = _reference(h_t, h_s, mask_src, Wa)
    assert almt.shape == (bs, sl) and ctx.shape == (bs, ds)
    assert jnp.allclose(almt, almt_ref, atol=1e-4, rtol=1e-4), "almt mismatch"
    assert jnp.allclose(ctx, ctx_ref, atol=1e-4, rtol=1e-4), "ctx mismatch"

    print("KERNEL_OK")
</pallas_src>

<mosaic_0001>
module attributes {stable_mosaic.version = 11 : i64} {
  func.func @_global_attention_kernel(%arg0: i32, %arg1: memref<8x48xf32, #tpu.memory_space<vmem>>, %arg2: memref<48x32xf32, #tpu.memory_space<vmem>>, %arg3: memref<8x8x32xf32, #tpu.memory_space<vmem>>, %arg4: memref<8x8xf32, #tpu.memory_space<vmem>>, %arg5: memref<8x8xf32, #tpu.memory_space<vmem>>, %arg6: memref<8x32xf32, #tpu.memory_space<vmem>>) attributes {dimension_semantics = [#tpu.dimension_semantics<parallel>], iteration_bounds = array<i64: 1>, scalar_prefetch = 0 : i64, scratch_operands = 0 : i64, tpu.core_type = #tpu.core_type<tc>, window_params = [{transform_indices = @transform_0, window_bounds = array<i64: 8, 48>}, {pipeline_mode = #tpu.pipeline_mode<synchronous>, transform_indices = @transform_1, window_bounds = array<i64: 48, 32>}, {transform_indices = @transform_2, window_bounds = array<i64: 8, 8, 32>}, {transform_indices = @transform_3, window_bounds = array<i64: 8, 8>}, {transform_indices = @transform_4, window_bounds = array<i64: 8, 8>}, {transform_indices = @transform_5, window_bounds = array<i64: 8, 32>}]} {
    %c0 = arith.constant 0 : index
    %c0_0 = arith.constant 0 : index
    %0 = vector.load %arg1[%c0, %c0_0] : memref<8x48xf32, #tpu.memory_space<vmem>>, vector<8x48xf32>
    %c0_1 = arith.constant 0 : index
    %c0_2 = arith.constant 0 : index
    %1 = vector.load %arg2[%c0_1, %c0_2] : memref<48x32xf32, #tpu.memory_space<vmem>>, vector<48x32xf32>
    %cst = arith.constant dense<0.000000e+00> : vector<8x32xf32>
    %2 = tpu.matmul %0, %1, %cst {dimension_numbers = #tpu.dot_dimension_numbers<[1], [0], [0], [1], [0, 0, 1, 1], [], []>} : vector<8x48xf32>, vector<48x32xf32>, vector<8x32xf32> -> vector<8x32xf32>
    %c0_3 = arith.constant 0 : index
    %c0_4 = arith.constant 0 : index
    %c0_5 = arith.constant 0 : index
    %3 = vector.load %arg3[%c0_3, %c0_4, %c0_5] : memref<8x8x32xf32, #tpu.memory_space<vmem>>, vector<8x8x32xf32>
    %4 = vector.shape_cast %2 : vector<8x32xf32> to vector<8x1x32xf32>
    %5 = vector.broadcast %4 : vector<8x1x32xf32> to vector<8x8x32xf32>
    %6 = arith.mulf %3, %5 : vector<8x8x32xf32>
    %cst_6 = arith.constant dense<0.000000e+00> : vector<8x8xf32>
    %7 = vector.multi_reduction <add>, %6, %cst_6 [2] : vector<8x8x32xf32> to vector<8x8xf32>
    %c0_7 = arith.constant 0 : index
    %c0_8 = arith.constant 0 : index
    %8 = vector.load %arg4[%c0_7, %c0_8] : memref<8x8xf32, #tpu.memory_space<vmem>>, vector<8x8xf32>
    %cst_9 = arith.constant 0.000000e+00 : f32
    %9 = vector.broadcast %cst_9 : f32 to vector<8x8xf32>
    %10 = arith.cmpf ogt, %8, %9 : vector<8x8xf32>
    %cst_10 = arith.constant -9.999900e+03 : f32
    %11 = vector.broadcast %cst_10 : f32 to vector<8x8xf32>
    %12 = arith.select %10, %7, %11 : vector<8x8xi1>, vector<8x8xf32>
    %cst_11 = arith.constant dense<0xFF800000> : vector<8xf32>
    %13 = vector.multi_reduction <maximumf>, %12, %cst_11 [1] : vector<8x8xf32> to vector<8xf32>
    %14 = vector.shape_cast %13 : vector<8xf32> to vector<8x1xf32>
    %15 = vector.broadcast %14 : vector<8x1xf32> to vector<8x8xf32>
    %16 = arith.subf %12, %15 : vector<8x8xf32>
    %17 = math.exp %16 : vector<8x8xf32>
    %cst_12 = arith.constant dense<0.000000e+00> : vector<8xf32>
    %18 = vector.multi_reduction <add>, %17, %cst_12 [1] : vector<8x8xf32> to vector<8xf32>
    %19 = vector.shape_cast %18 : vector<8xf32> to vector<8x1xf32>
    %20 = vector.broadcast %19 : vector<8x1xf32> to vector<8x8xf32>
    %21 = arith.divf %17, %20 : vector<8x8xf32>
    %22 = vector.shape_cast %21 : vector<8x8xf32> to vector<8x8x1xf32>
    %23 = vector.broadcast %22 : vector<8x8x1xf32> to vector<8x8x32xf32>
    %24 = arith.mulf %23, %3 : vector<8x8x32xf32>
    %cst_13 = arith.constant dense<0.000000e+00> : vector<8x32xf32>
    %25 = vector.multi_reduction <add>, %24, %cst_13 [1] : vector<8x8x32xf32> to vector<8x32xf32>
    %c0_14 = arith.constant 0 : index
    %c0_15 = arith.constant 0 : index
    %26 = vector.load %arg5[%c0_14, %c0_15] : memref<8x8xf32, #tpu.memory_space<vmem>>, vector<8x8xf32>
    tpu.vector_store %arg5[%c0_14, %c0_15], %21 {strides = array<i32>} : memref<8x8xf32, #tpu.memory_space<vmem>>, vector<8x8xf32>,
    %c0_16 = arith.constant 0 : index
    %c0_17 = arith.constant 0 : index
    %27 = vector.load %arg6[%c0_16, %c0_17] : memref<8x32xf32, #tpu.memory_space<vmem>>, vector<8x32xf32>
    tpu.vector_store %arg6[%c0_16, %c0_17], %25 {strides = array<i32>} : memref<8x32xf32, #tpu.memory_space<vmem>>, vector<8x32xf32>,
    return
  }
  func.func @transform_0(%arg0: i32) -> (i32, i32) {
    %c0_i32 = arith.constant 0 : i32
    %c0_i32_0 = arith.constant 0 : i32
    return %arg0, %c0_i32 : i32, i32
  }
  func.func @transform_1(%arg0: i32) -> (i32, i32) {
    %c0_i32 = arith.constant 0 : i32
    %c0_i32_0 = arith.constant 0 : i32
    %c0_i32_1 = arith.constant 0 : i32
    return %c0_i32, %c0_i32_0 : i32, i32
  }
  func.func @transform_2(%arg0: i32) -> (i32, i32, i32) {
    %c0_i32 = arith.constant 0 : i32
    %c0_i32_0 = arith.constant 0 : i32
    %c0_i32_1 = arith.constant 0 : i32
    return %arg0, %c0_i32, %c0_i32_0 : i32, i32, i32
  }
  func.func @transform_3(%arg0: i32) -> (i32, i32) {
    %c0_i32 = arith.constant 0 : i32
    %c0_i32_0 = arith.constant 0 : i32
    return %arg0, %c0_i32 : i32, i32
  }
  func.func @transform_4(%arg0: i32) -> (i32, i32) {
    %c0_i32 = arith.constant 0 : i32
    %c0_i32_0 = arith.constant 0 : i32
    return %arg0, %c0_i32 : i32, i32
  }
  func.func @transform_5(%arg0: i32) -> (i32, i32) {
    %c0_i32 = arith.constant 0 : i32
    %c0_i32_0 = arith.constant 0 : i32
    return %arg0, %c0_i32 : i32, i32
  }
}

</mosaic_0001>

<llo_original>
// kernel: global_attention.1
$region0: #{global_attention.1}
  #allocation0 [shape = 'u32[]', space=smem, size = 0x4, offset = 0x4, fixed_abs, tag = 'smem constant byte address 0x4 - core index']
  #allocation1 [shape = 'u32[144,128]{1,0:T(1,128)}', space=vmem, size = 0x12000, scoped, tag = 'internal scratch']
  %s0 = inlined_call_operand.vmem [shape: f32[8,48], index: 0, kind: input, shape index: {}]
  %s1 = inlined_call_operand.vmem [shape: f32[48,32], index: 1, kind: input, shape index: {}]
  %s2 = inlined_call_operand.vmem [shape: f32[8,8,32], index: 2, kind: input, shape index: {}]
  %s3 = inlined_call_operand.vmem [shape: f32[8,8], index: 3, kind: input, shape index: {}]
  %s4 = inlined_call_operand.vmem [shape: f32[8,8], index: 4, kind: output, shape index: {0}]
  %s5 = inlined_call_operand.vmem [shape: f32[8,32], index: 5, kind: output, shape index: {1}]
  %6 = xla_tuple %s4, %s5
  %s7 = sld [smem:[#allocation0]]
  $region34: #{global_attention.1} parent=0
    _
  %s9 = ssub.s32 1, %s7
  %s10 = scalar_select 0, %s9, %s7
  // Predicated region
  $region2: #{global_attention.1} parent=0 // pred_check
    _
  $region3: #{global_attention.1} parent=0 // pred_check_branch
    %12 = sbr.rel (0) target = $region5
  $region4: #{global_attention.1} parent=0 // pred_region
    _
  $region5: #{global_attention.1} parent=0 // pred_fallthru
    _
  // Predicated region
  $region6: #{global_attention.1} parent=0 // pred_check
    _
  $region7: #{global_attention.1} parent=0 // pred_check_branch
    %14 = sbr.rel (0) target = $region9
  $region8: #{global_attention.1} parent=0 // pred_region
    _
  $region9: #{global_attention.1} parent=0 // pred_fallthru
    _
  // Predicated region
  $region10: #{global_attention.1} parent=0 // pred_check
    _
  $region11: #{global_attention.1} parent=0 // pred_check_branch
    %16 = sbr.rel (0) target = $region13
  $region12: #{global_attention.1} parent=0 // pred_region
    _
  $region13: #{global_attention.1} parent=0 // pred_fallthru
    _
  // Predicated region
  $region14: #{global_attention.1} parent=0 // pred_check
    _
  $region15: #{global_attention.1} parent=0 // pred_check_branch
    %18 = sbr.rel (0) target = $region17
  $region16: #{global_attention.1} parent=0 // pred_region
    _
  $region17: #{global_attention.1} parent=0 // pred_fallthru
    _
  %v19 = vld [vmem:[%s0] sm:$0xff]
  %v20 = vld [vmem:[%s1] sm:$0xff]
  %v21 = vld [vmem:[%s1 + $0x8] sm:$0xff]
  %v22 = vld [vmem:[%s1 + $0x10] sm:$0xff]
  %v23 = vld [vmem:[%s1 + $0x18] sm:$0xff]
  %v24 = vld [vmem:[%s1 + $0x20] sm:$0xff]
  %v25 = vld [vmem:[%s1 + $0x28] sm:$0xff]
  %vm26 = vcmask 392192
  %v28 = vsel %vm26, %v19, 0
  %30 = vmatprep.subr.mxu0 0.0
  %31 = vmatpush1.msra.mxu0 %v20
  %32 = vmatprep.subr.mxu0 0.0
  %33 = vmatpush1.msra.mxu0 %v21
  %34 = vmatprep.subr.mxu0 0.0
  %35 = vmatpush1.msra.mxu0 %v22
  %36 = vmatprep.subr.mxu0 0.0
  %37 = vmatpush1.msra.mxu0 %v23
  %38 = vmatprep.subr.mxu0 0.0
  %39 = vmatpush1.msra.mxu0 %v24
  %40 = vmatprep.subr.mxu0 0.0
  %41 = vmatpush1.msra.mxu0 %v25
  %42 = vmatprep.subr.mxu0 0.0
  %43 = vmatpush1.msra.mxu0 0.0
  %44 = vmatprep.subr.mxu0 0.0
  %45 = vmatpush1.msra.mxu0 0.0
  %46 = vmatprep.subr.mxu0 0.0
  %47 = vmatpush1.msra.mxu0 0.0
  %48 = vmatprep.subr.mxu0 0.0
  %49 = vmatpush1.msra.mxu0 0.0
  %50 = vmatprep.subr.mxu0 0.0
  %51 = vmatpush1.msra.mxu0 0.0
  %52 = vmatprep.subr.mxu0 0.0
  %53 = vmatpush1.msra.mxu0 0.0
  %54 = vmatprep.subr.mxu0 0.0
  %55 = vmatpush1.msra.mxu0 0.0
  %56 = vmatprep.subr.mxu0 0.0
  %57 = vmatpush1.msra.mxu0 0.0
  %58 = vmatprep.subr.mxu0 0.0
  %59 = vmatpush1.msra.mxu0 0.0
  %60 = vmatprep.subr.mxu0 0.0
  %61 = vmatpush1.msra.mxu0 0.0
  %62 = vmatprep.subr.mxu0 0.0
  %63 = vmatpush1.msra.mxu0 0.0
  %64 = vmatprep.subr.mxu0 0.0
  %65 = vmatpush1.msra.mxu0 0.0
  %66 = vmatprep.subr.mxu0 0.0
  %67 = vmatpush1.msra.mxu0 0.0
  %68 = vmatprep.subr.mxu0 0.0
  %69 = vmatpush1.msra.mxu0 0.0
  %70 = vmatprep.subr.mxu0 0.0
  %71 = vmatpush1.msra.mxu0 0.0
  %72 = vmatprep.subr.mxu0 0.0
  %73 = vmatpush1.msra.mxu0 0.0
  %74 = vmatprep.subr.mxu0 0.0
  %75 = vmatpush1.msra.mxu0 0.0
  %76 = vmatprep.subr.mxu0 0.0
  %77 = vmatpush1.msra.mxu0 0.0
  %78 = vmatprep.subr.mxu0 0.0
  %79 = vmatpush1.msra.mxu0 0.0
  %80 = vmatprep.subr.mxu0 0.0
  %81 = vmatpush1.msra.mxu0 0.0
  %82 = vmatprep.subr.mxu0 0.0
  %83 = vmatpush1.msra.mxu0 0.0
  %84 = vmatprep.subr.mxu0 0.0
  %85 = vmatpush1.msra.mxu0 0.0
  %86 = vmatprep.subr.mxu0 0.0
  %87 = vmatpush1.msra.mxu0 0.0
  %88 = vmatprep.subr.mxu0 0.0
  %89 = vmatpush1.msra.mxu0 0.0
  %90 = vmatprep.subr.mxu0 0.0
  %91 = vmatpush1.msra.mxu0 0.0
  %92 = vmatprep.subr.mxu0 0.0
  %93 = vmatpush1.msra.mxu0 0.0
  %94 = vmatprep.mubr.f32.mxu0 0.0
  %95 = vmatmul.mubr.f32.gmra.mrb[0].mxu0 %v28
  %v96 = vpop.f32.mrb[0].mxu0
  %v97 = vadd.f32 0.0, %v96
  %v98 = vpop.f32.mrb[0].mxu0
  %99 = vdwg.mxu0
  %v100 = vld [vmem:[%s2] sm:$0xff]
  %v101 = vld [vmem:[%s2 + $0x8] sm:$0xff]
  %v102 = vld [vmem:[%s2 + $0x10] sm:$0xff]
  %v103 = vld [vmem:[%s2 + $0x18] sm:$0xff]
  %v104 = vld [vmem:[%s2 + $0x20] sm:$0xff]
  %v105 = vld [vmem:[%s2 + $0x28] sm:$0xff]
  %v106 = vld [vmem:[%s2 + $0x30] sm:$0xff]
  %v107 = vld [vmem:[%s2 + $0x38] sm:$0xff]
  %v109 = vcombine.high %v97, %v97
  %v111 = vunpack.c.l.s4 1966171168
  %v112 = vunpack.c.0.s8 %v111
  %v113 = vlaneseq
  %v114 = vshrl.u32 %v113, 7
  %v115 = vsub.s32 %v112, %v114
  %v116 = vrot.slane %v97, %v115
  %v118 = vunpack.c.l.s4 1966171168
  %v119 = vunpack.c.0.s8 %v118
  %v120 = vlaneseq
  %v121 = vshrl.u32 %v120, 7
  %v122 = vsub.s32 %v119, %v121
  %v123 = vrot.slane %v109, %v122
  %v124 = vcombine.high %v116, %v116
  %v125 = vcombine.high %v123, %v123
  %v127 = vunpack.c.l.s4 1966171168
  %v128 = vunpack.c.0.s8 %v127
  %v129 = vlaneseq
  %v130 = vshrl.u32 %v129, 7
  %v131 = vsub.s32 %v128, %v130
  %v132 = vrot.slane %v116, %v131
  %v134 = vunpack.c.l.s4 1966171168
  %v135 = vunpack.c.0.s8 %v134
  %v136 = vlaneseq
  %v137 = vshrl.u32 %v136, 7
  %v138 = vsub.s32 %v135, %v137
  %v139 = vrot.slane %v123, %v138
  %v141 = vunpack.c.l.s4 1966171168
  %v142 = vunpack.c.0.s8 %v141
  %v143 = vlaneseq
  %v144 = vshrl.u32 %v143, 7
  %v145 = vsub.s32 %v142, %v144
  %v146 = vrot.slane %v124, %v145
  %v148 = vunpack.c.l.s4 1966171168
  %v149 = vunpack.c.0.s8 %v148
  %v150 = vlaneseq
  %v151 = vshrl.u32 %v150, 7
  %v152 = vsub.s32 %v149, %v151
  %v153 = vrot.slane %v125, %v152
  %v154 = vcombine.high %v132, %v132
  %v155 = vcombine.high %v139, %v139
  %v156 = vcombine.high %v146, %v146
  %v157 = vcombine.high %v153, %v153
  %v158 = vlaneseq
  %v159 = vshrl.u32 %v158, 7
  %v160 = vsub.s32 0, %v159
  %v161 = vrot.slane %v132, %v160
  %v162 = vlaneseq
  %v163 = vshrl.u32 %v162, 7
  %v164 = vsub.s32 0, %v163
  %v165 = vrot.slane %v146, %v164
  %v166 = vlaneseq
  %v167 = vshrl.u32 %v166, 7
  %v168 = vsub.s32 0, %v167
  %v169 = vrot.slane %v154, %v168
  %v170 = vlaneseq
  %v171 = vshrl.u32 %v170, 7
  %v172 = vsub.s32 0, %v171
  %v173 = vrot.slane %v156, %v172
  %v174 = vlaneseq
  %v175 = vshrl.u32 %v174, 7
  %v176 = vsub.s32 0, %v175
  %v177 = vrot.slane %v139, %v176
  %v178 = vlaneseq
  %v179 = vshrl.u32 %v178, 7
  %v180 = vsub.s32 0, %v179
  %v181 = vrot.slane %v153, %v180
  %v182 = vlaneseq
  %v183 = vshrl.u32 %v182, 7
  %v184 = vsub.s32 0, %v183
  %v185 = vrot.slane %v155, %v184
  %v186 = vlaneseq
  %v187 = vshrl.u32 %v186, 7
  %v188 = vsub.s32 0, %v187
  %v189 = vrot.slane %v157, %v188
  %v198 = vmul.f32 %v100, %v161
  %v199 = vmul.f32 %v101, %v165
  %v200 = vmul.f32 %v102, %v169
  %v201 = vmul.f32 %v103, %v173
  %v202 = vmul.f32 %v104, %v177
  %v203 = vmul.f32 %v105, %v181
  %v204 = vmul.f32 %v106, %v185
  %v205 = vmul.f32 %v107, %v189
  %vm206 = vcmask 261120
  %v207 = vsel %vm206, %v198, 0.0
  %208 = vadd.xlane.f32.xlu0 %v207
  %v209 = vpop.xlane.xlu0 %208
  %v210 = vsel %vm206, %v199, 0.0
  %211 = vadd.xlane.f32.xlu0 %v210
  %v212 = vpop.xlane.xlu0 %211
  %v213 = vsel %vm206, %v200, 0.0
  %214 = vadd.xlane.f32.xlu0 %v213
  %v215 = vpop.xlane.xlu0 %214
  %v216 = vsel %vm206, %v201, 0.0
  %217 = vadd.xlane.f32.xlu0 %v216
  %v218 = vpop.xlane.xlu0 %217
  %v219 = vsel %vm206, %v202, 0.0
  %220 = vadd.xlane.f32.xlu0 %v219
  %v221 = vpop.xlane.xlu0 %220
  %v222 = vsel %vm206, %v203, 0.0
  %223 = vadd.xlane.f32.xlu0 %v222
  %v224 = vpop.xlane.xlu0 %223
  %v225 = vsel %vm206, %v204, 0.0
  %226 = vadd.xlane.f32.xlu0 %v225
  %v227 = vpop.xlane.xlu0 %226
  %v228 = vsel %vm206, %v205, 0.0
  %229 = vadd.xlane.f32.xlu0 %v228
  %v230 = vpop.xlane.xlu0 %229
  %v231 = vld [vmem:[%s3] sm:$0xff]
  %vm232 = vcmp.gt.f32.partialorder %v231, 0.0
  %v241 = vlaneseq
  %v242 = vand.u32 %v241, 127
  %v243 = vlaneseq
  %v244 = vshrl.u32 %v243, 7
  %v245 = vsub.s32 %v242, %v244
  %v246 = vrot.slane %v209, %v245
  %v247 = vlaneseq
  %v248 = vshrl.u32 %v247, 7
  %v249 = vsub.s32 %v242, %v248
  %v250 = vrot.slane %v212, %v249
  %v251 = vlaneseq
  %v252 = vshrl.u32 %v251, 7
  %v253 = vsub.s32 %v242, %v252
  %v254 = vrot.slane %v215, %v253
  %v255 = vlaneseq
  %v256 = vshrl.u32 %v255, 7
  %v257 = vsub.s32 %v242, %v256
  %v258 = vrot.slane %v218, %v257
  %v259 = vlaneseq
  %v260 = vshrl.u32 %v259, 7
  %v261 = vsub.s32 %v242, %v260
  %v262 = vrot.slane %v221, %v261
  %v263 = vlaneseq
  %v264 = vshrl.u32 %v263, 7
  %v265 = vsub.s32 %v242, %v264
  %v266 = vrot.slane %v224, %v265
  %v267 = vlaneseq
  %v268 = vshrl.u32 %v267, 7
  %v269 = vsub.s32 %v242, %v268
  %v270 = vrot.slane %v227, %v269
  %v271 = vlaneseq
  %v272 = vshrl.u32 %v271, 7
  %v273 = vsub.s32 %v242, %v272
  %v274 = vrot.slane %v230, %v273
  %vm275 = vcmask 1041409
  %v276 = vsel %vm275, %v250, %v246
  %vm277 = vcmask 1042434
  %v278 = vsel %vm277, %v254, %v276
  %vm279 = vcmask 1043459
  %v280 = vsel %vm279, %v258, %v278
  %vm281 = vcmask 1044484
  %v282 = vsel %vm281, %v262, %v280
  %vm283 = vcmask 1045509
  %v284 = vsel %vm283, %v266, %v282
  %vm285 = vcmask 1046534
  %v286 = vsel %vm285, %v270, %v284
  %vm287 = vcmask 1047559
  %v288 = vsel %vm287, %v274, %v286
  %v290 = vsel %vm232, %v288, -9999.9
  %vm291 = vcmask 64512
  %v292 = vsel %vm291, %v290, -inf
  %293 = vmax.xlane.f32.xlu0 %v292
  %v294 = vpop.xlane.xlu0 %293
  %v295 = vsub.f32 %v290, %v294
  %v296 = vmul.f32 %v295, 1.442695
  %v297 = vpow.pop %v296
  %v298 = vsel %vm291, %v297, 0.0
  %299 = vadd.xlane.f32.xlu0 %v298
  %v300 = vpop.xlane.xlu0 %299
  %v301 = vrcp.pop %v300
  %v302 = vmul.f32 %v297, %v301
  %v303 = vlaneseq
  %v304 = vshrl.u32 %v303, 7
  %v305 = vsub.s32 0, %v304
  %v306 = vrot.slane %v302, %v305
  %308 = vbcast.lane.b32.xlu0 %v306, 256
  %v309 = vpop.permute.xlu0 %308
  %v310 = vlaneseq
  %v311 = vshrl.u32 %v310, 7
  %v312 = vsub.s32 1, %v311
  %v313 = vrot.slane %v302, %v312
  %315 = vbcast.lane.b32.xlu0 %v313, 256
  %v316 = vpop.permute.xlu0 %315
  %v317 = vlaneseq
  %v318 = vshrl.u32 %v317, 7
  %v319 = vsub.s32 2, %v318
  %v320 = vrot.slane %v302, %v319
  %322 = vbcast.lane.b32.xlu0 %v320, 256
  %v323 = vpop.permute.xlu0 %322
  %v324 = vlaneseq
  %v325 = vshrl.u32 %v324, 7
  %v326 = vsub.s32 3, %v325
  %v327 = vrot.slane %v302, %v326
  %329 = vbcast.lane.b32.xlu0 %v327, 256
  %v330 = vpop.permute.xlu0 %329
  %v331 = vlaneseq
  %v332 = vshrl.u32 %v331, 7
  %v333 = vsub.s32 4, %v332
  %v334 = vrot.slane %v302, %v333
  %336 = vbcast.lane.b32.xlu0 %v334, 256
  %v337 = vpop.permute.xlu0 %336
  %v338 = vlaneseq
  %v339 = vshrl.u32 %v338, 7
  %v340 = vsub.s32 5, %v339
  %v341 = vrot.slane %v302, %v340
  %343 = vbcast.lane.b32.xlu0 %v341, 256
  %v344 = vpop.permute.xlu0 %343
  %v345 = vlaneseq
  %v346 = vshrl.u32 %v345, 7
  %v347 = vsub.s32 6, %v346
  %v348 = vrot.slane %v302, %v347
  %350 = vbcast.lane.b32.xlu0 %v348, 256
  %v351 = vpop.permute.xlu0 %350
  %v352 = vlaneseq
  %v353 = vshrl.u32 %v352, 7
  %v354 = vsub.s32 7, %v353
  %v355 = vrot.slane %v302, %v354
  %357 = vbcast.lane.b32.xlu0 %v355, 256
  %v358 = vpop.permute.xlu0 %357
  %v359 = vmul.f32 %v309, %v100
  %v360 = vmul.f32 %v316, %v101
  %v361 = vmul.f32 %v323, %v102
  %v362 = vmul.f32 %v330, %v103
  %v363 = vmul.f32 %v337, %v104
  %v364 = vmul.f32 %v344, %v105
  %v365 = vmul.f32 %v351, %v106
  %v366 = vmul.f32 %v358, %v107
  %v367 = vsel %vm206, %v359, 0.0
  %v368 = vrot.slane %v367, 4
  %v369 = vadd.f32 %v367, %v368
  %v370 = vrot.slane %v369, 2
  %v371 = vadd.f32 %v369, %v370
  %v372 = vrot.slane %v371, 1
  %v373 = vadd.f32 %v371, %v372
  %v374 = vsel %vm206, %v360, 0.0
  %v375 = vrot.slane %v374, 4
  %v376 = vadd.f32 %v374, %v375
  %v377 = vrot.slane %v376, 2
  %v378 = vadd.f32 %v376, %v377
  %v379 = vrot.slane %v378, 1
  %v380 = vadd.f32 %v378, %v379
  %v381 = vsel %vm206, %v361, 0.0
  %v382 = vrot.slane %v381, 4
  %v383 = vadd.f32 %v381, %v382
  %v384 = vrot.slane %v383, 2
  %v385 = vadd.f32 %v383, %v384
  %v386 = vrot.slane %v385, 1
  %v387 = vadd.f32 %v385, %v386
  %v388 = vsel %vm206, %v362, 0.0
  %v389 = vrot.slane %v388, 4
  %v390 = vadd.f32 %v388, %v389
  %v391 = vrot.slane %v390, 2
  %v392 = vadd.f32 %v390, %v391
  %v393 = vrot.slane %v392, 1
  %v394 = vadd.f32 %v392, %v393
  %v395 = vsel %vm206, %v363, 0.0
  %v396 = vrot.slane %v395, 4
  %v397 = vadd.f32 %v395, %v396
  %v398 = vrot.slane %v397, 2
  %v399 = vadd.f32 %v397, %v398
  %v400 = vrot.slane %v399, 1
  %v401 = vadd.f32 %v399, %v400
  %v402 = vsel %vm206, %v364, 0.0
  %v403 = vrot.slane %v402, 4
  %v404 = vadd.f32 %v402, %v403
  %v405 = vrot.slane %v404, 2
  %v406 = vadd.f32 %v404, %v405
  %v407 = vrot.slane %v406, 1
  %v408 = vadd.f32 %v406, %v407
  %v409 = vsel %vm206, %v365, 0.0
  %v410 = vrot.slane %v409, 4
  %v411 = vadd.f32 %v409, %v410
  %v412 = vrot.slane %v411, 2
  %v413 = vadd.f32 %v411, %v412
  %v414 = vrot.slane %v413, 1
  %v415 = vadd.f32 %v413, %v414
  %v416 = vsel %vm206, %v366, 0.0
  %v417 = vrot.slane %v416, 4
  %v418 = vadd.f32 %v416, %v417
  %v419 = vrot.slane %v418, 2
  %v420 = vadd.f32 %v418, %v419
  %v421 = vrot.slane %v420, 1
  %v422 = vadd.f32 %v420, %v421
  %423 = vst.msk [vmem:[%s4] sm:$0xff] %vm291, %v302
  %v432 = vsel %vm275, %v380, %v373
  %v433 = vsel %vm277, %v387, %v432
  %v434 = vsel %vm279, %v394, %v433
  %v435 = vsel %vm281, %v401, %v434
  %v436 = vsel %vm283, %v408, %v435
  %v437 = vsel %vm285, %v415, %v436
  %v438 = vsel %vm287, %v422, %v437
  %440 = vst.msk [vmem:[%s5] sm:$0xff] %vm206, %v438
  // Predicated region
  $region18: #{global_attention.1} parent=0 // pred_check
    _
  $region19: #{global_attention.1} parent=0 // pred_check_branch
    %442 = sbr.rel (0) target = $region21
  $region20: #{global_attention.1} parent=0 // pred_region
    _
  $region21: #{global_attention.1} parent=0 // pred_fallthru
    _
  // Predicated region
  $region22: #{global_attention.1} parent=0 // pred_check
    _
  $region23: #{global_attention.1} parent=0 // pred_check_branch
    %444 = sbr.rel (0) target = $region25
  $region24: #{global_attention.1} parent=0 // pred_region
    _
  $region25: #{global_attention.1} parent=0 // pred_fallthru
    _
  // Predicated region
  $region26: #{global_attention.1} parent=0 // pred_check
    _
  $region27: #{global_attention.1} parent=0 // pred_check_branch
    %446 = sbr.rel (0) target = $region29
  $region28: #{global_attention.1} parent=0 // pred_region
    _
  $region29: #{global_attention.1} parent=0 // pred_fallthru
    _
  // Predicated region
  $region30: #{global_attention.1} parent=0 // pred_check
    _
  $region31: #{global_attention.1} parent=0 // pred_check_branch
    %448 = sbr.rel (0) target = $region33
  $region32: #{global_attention.1} parent=0 // pred_region
    _
  $region33: #{global_attention.1} parent=0 // pred_fallthru
    _

</llo_original>
